<compile_context>
chip_gen: v5e
topology: v5e:2x2
jax: 0.10.0
libtpu: 0.0.40
codegen_flags: <defaults>
</compile_context>

<pallas_src>
import functools
import math

import jax
import jax.numpy as jnp
from jax.experimental import pallas as pl
from jax.experimental.pallas import tpu as pltpu

KERNEL_SET = [2, 3, 6, 7]
MAX_K = 7


def _round_up(x, m):
    return ((x + m - 1) // m) * m


def fold_dilated_inception_params(weights, biases, compute_dtype=jnp.bfloat16):
    """Fold the four branch convs into one 7-tap conv.

    Returns:
      w2: (MAX_K*cin, cout) in compute_dtype, column order (tap m, in-channel c).
      b2: (1, cout) float32 (bias add stays in f32).
    Call once per parameter update, not per forward.
    """
    cout_per, cin = weights[0].shape[0], weights[0].shape[1]
    cout = cout_per * len(KERNEL_SET)
    w_full = jnp.zeros((MAX_K, cin, cout), jnp.float32)
    b_full = jnp.zeros((cout,), jnp.float32)
    for bi, (k, w, b) in enumerate(zip(KERNEL_SET, weights, biases)):
        w_t = jnp.transpose(w[:, :, 0, :], (2, 1, 0)).astype(jnp.float32)  # (k, cin, cout_per)
        w_full = w_full.at[MAX_K - k:, :, bi * cout_per:(bi + 1) * cout_per].set(w_t)
        b_full = b_full.at[bi * cout_per:(bi + 1) * cout_per].set(b.astype(jnp.float32))
    w2 = w_full.reshape(MAX_K * cin, cout).astype(compute_dtype)
    b2 = b_full.reshape(1, cout)
    return w2, b2


def _dilated_inception_kernel(x_ref, w_ref, b_ref, o_ref, *, dilation, t_out, tile_p):
    # x_ref: (T, tile_p, cin)       time-major row block, compute dtype
    # w_ref: (MAX_K*cin, cout)      folded weight, compute dtype (VMEM-resident)
    # b_ref: (1, cout)              folded bias, f32 (VMEM-resident)
    # o_ref: (t_out, tile_p, cout)  output block, (time, row) order, f32
    cin = x_ref.shape[-1]
    cout = o_ref.shape[-1]
    m_rows = t_out * tile_p
    # Time-major taps: leading-dim slices and the (t_out, tile_p) merge are
    # sublane-tile aligned (tile_p % sublane == 0) -> free views, no relayout.
    taps = [
        x_ref[m * dilation: m * dilation + t_out, :, :].reshape(m_rows, cin)
        for m in range(MAX_K)
    ]
    a = jnp.concatenate(taps, axis=-1)              # (m_rows, MAX_K*cin) im2col in regs
    y = jnp.dot(a, w_ref[...], preferred_element_type=jnp.float32)
    y = y + b_ref[...]
    o_ref[...] = y.reshape(t_out, tile_p, cout).astype(o_ref.dtype)


def _pick_tiling(P, T, t_out, cin, cout, in_itemsize, out_itemsize, sublane):
    try:
        vmem_cap = int(pltpu.get_tpu_info().vmem_capacity_bytes)
    except Exception:
        vmem_cap = 64 * 1024 * 1024          # conservative fallback (v7x per-TC)
    budget = int(vmem_cap * 0.6)             # headroom for compiler scratch / spill
    # Per-row working set: double-buffered x & out blocks + in-register im2col
    # slab + f32 matmul result.
    row_bytes = (2 * T * cin * in_itemsize
                 + 2 * t_out * cout * out_itemsize
                 + MAX_K * t_out * cin * in_itemsize
                 + t_out * cout * 4)
    tile_p_max = (budget // max(1, row_bytes)) // sublane * sublane
    tile_p_max = max(sublane, min(2048, tile_p_max))
    tile_p_max = min(tile_p_max, _round_up(P, sublane))
    # Balance blocks so the last one is not mostly padding; odd block counts are
    # fine for megacore sharding (no extra padded block added).
    num_blocks = max(1, math.ceil(P / tile_p_max))
    tile_p = _round_up(math.ceil(P / num_blocks), sublane)
    vmem_limit = min(int(vmem_cap * 0.85), vmem_cap - (4 << 20))
    return tile_p, num_blocks, vmem_limit


def dilated_inception_rows(x_tpc, w2, b2, dilation_factor=2):
    """Time-major channels-last forward.

    x_tpc: (T, P, cin) in compute dtype (same dtype as w2).
    Returns (t_out, P, cout) float32.
    """
    T, P, cin = x_tpc.shape
    cout = w2.shape[1]
    d = dilation_factor
    t_out = T - d * (MAX_K - 1)
    assert t_out > 0, "sequence too short for k=7 dilated conv"

    in_itemsize = jnp.dtype(x_tpc.dtype).itemsize
    sublane = 8 * max(1, 4 // in_itemsize)            # f32 -> 8, bf16 -> 16
    tile_p, num_blocks, vmem_limit = _pick_tiling(
        P, T, t_out, cin, cout, in_itemsize, 4, sublane)
    P_pad = num_blocks * tile_p
    if P_pad != P:
        x_tpc = jnp.pad(x_tpc, ((0, 0), (0, P_pad - P), (0, 0)))

    kernel = functools.partial(_dilated_inception_kernel,
                               dilation=d, t_out=t_out, tile_p=tile_p)

    out = pl.pallas_call(
        kernel,
        out_shape=jax.ShapeDtypeStruct((t_out, P_pad, cout), jnp.float32),
        grid=(num_blocks,),
        in_specs=[
            pl.BlockSpec((T, tile_p, cin), lambda i: (0, i, 0)),      # x row block
            pl.BlockSpec((MAX_K * cin, cout), lambda i: (0, 0)),      # weight (resident)
            pl.BlockSpec((1, cout), lambda i: (0, 0)),                # bias (resident)
        ],
        out_specs=pl.BlockSpec((t_out, tile_p, cout), lambda i: (0, i, 0)),
        compiler_params=pltpu.CompilerParams(
            dimension_semantics=("parallel",),
            vmem_limit_bytes=vmem_limit),
    )(x_tpc, w2, b2)
    return out[:, :P, :]


def dilated_inception_forward(x, weights, biases, dilation_factor=2,
                              compute_dtype=jnp.bfloat16, folded_params=None):
    """NCHW-compatible forward matching the PyTorch module.

    x: (B, cin, N, T). weights[i]: (cout_per, cin, 1, k_i). biases[i]: (cout_per,).
    Returns (B, cout, N, t_out) in x.dtype.
    """
    B, cin, N, T = x.shape
    if folded_params is None:
        folded_params = fold_dilated_inception_params(weights, biases, compute_dtype)
    w2, b2 = folded_params

    # TODO(synk): layout plumbing kept only for the NCHW interface; in-model use
    # should stay in (T, B*N, C) and call dilated_inception_rows directly.
    x_tpc = jnp.transpose(x, (3, 0, 2, 1)).reshape(T, B * N, cin).astype(w2.dtype)

    out = dilated_inception_rows(x_tpc, w2, b2, dilation_factor)   # (t_out, B*N, cout)
    t_out, _, cout = out.shape
    out = out.reshape(t_out, B, N, cout)
    return jnp.transpose(out, (1, 3, 2, 0)).astype(x.dtype)        # (B, cout, N, t_out)


def _reference(x, weights, biases, d):
    """Pure-JAX f32 reference mirroring the PyTorch forward exactly."""
    outs = []
    for k, w, b in zip(KERNEL_SET, weights, biases):
        o = jax.lax.conv_general_dilated(
            x, w, window_strides=(1, 1), padding="VALID",
            rhs_dilation=(1, d),
            dimension_numbers=("NCHW", "OIHW", "NCHW"))
        outs.append(o + b[None, :, None, None])
    t_min = outs[-1].shape[3]
    outs = [o[..., -t_min:] for o in outs]
    return jnp.concatenate(outs, axis=1)


if __name__ == "__main__":
    B, cin, cout, N, T = 2, 4, 8, 8, 19
    dilation = 2  # default dilation_factor=2

    key = jax.random.PRNGKey(0)
    kx, *kws = jax.random.split(key, 1 + 2 * len(KERNEL_SET))

    x = jax.random.normal(kx, (B, cin, N, T), jnp.float32)

    cout_per = cout // len(KERNEL_SET)
    weights, biases = [], []
    for i, k in enumerate(KERNEL_SET):
        kw, kb = kws[2 * i], kws[2 * i + 1]
        weights.append(0.1 * jax.random.normal(kw, (cout_per, cin, 1, k), jnp.float32))
        biases.append(0.1 * jax.random.normal(kb, (cout_per,), jnp.float32))

    folded = fold_dilated_inception_params(weights, biases, jnp.bfloat16)
    out = dilated_inception_forward(x, weights, biases, dilation_factor=dilation,
                                    folded_params=folded)
    out = jax.block_until_ready(out)

    ref = _reference(x, weights, biases, dilation)
    assert out.shape == ref.shape, (out.shape, ref.shape)
    # bf16 compute path vs f32 reference -> looser tolerance.
    assert jnp.allclose(out, ref, atol=2e-2, rtol=2e-2), float(jnp.max(jnp.abs(out - ref)))

    print("KERNEL_OK")
</pallas_src>

<mosaic_0001>
module attributes {stable_mosaic.version = 11 : i64} {
  func.func @_dilated_inception_kernel(%arg0: i32, %arg1: memref<19x16x4xbf16, #tpu.memory_space<vmem>>, %arg2: memref<28x8xbf16, #tpu.memory_space<vmem>>, %arg3: memref<1x8xf32, #tpu.memory_space<vmem>>, %arg4: memref<7x16x8xf32, #tpu.memory_space<vmem>>) attributes {dimension_semantics = [#tpu.dimension_semantics<parallel>], iteration_bounds = array<i64: 1>, scalar_prefetch = 0 : i64, scratch_operands = 0 : i64, tpu.core_type = #tpu.core_type<tc>, window_params = [{transform_indices = @transform_0, window_bounds = array<i64: 19, 16, 4>}, {pipeline_mode = #tpu.pipeline_mode<synchronous>, transform_indices = @transform_1, window_bounds = array<i64: 28, 8>}, {pipeline_mode = #tpu.pipeline_mode<synchronous>, transform_indices = @transform_2, window_bounds = array<i64: 1, 8>}, {transform_indices = @transform_3, window_bounds = array<i64: 7, 16, 8>}]} {
    %c0 = arith.constant 0 : index
    %c0_0 = arith.constant 0 : index
    %c0_1 = arith.constant 0 : index
    %0 = vector.load %arg1[%c0, %c0_0, %c0_1] : memref<19x16x4xbf16, #tpu.memory_space<vmem>>, vector<7x16x4xbf16>
    %1 = vector.shape_cast %0 : vector<7x16x4xbf16> to vector<112x4xbf16>
    %c2 = arith.constant 2 : index
    %c0_2 = arith.constant 0 : index
    %c0_3 = arith.constant 0 : index
    %2 = vector.load %arg1[%c2, %c0_2, %c0_3] : memref<19x16x4xbf16, #tpu.memory_space<vmem>>, vector<7x16x4xbf16>
    %3 = vector.shape_cast %2 : vector<7x16x4xbf16> to vector<112x4xbf16>
    %c4 = arith.constant 4 : index
    %c0_4 = arith.constant 0 : index
    %c0_5 = arith.constant 0 : index
    %4 = vector.load %arg1[%c4, %c0_4, %c0_5] : memref<19x16x4xbf16, #tpu.memory_space<vmem>>, vector<7x16x4xbf16>
    %5 = vector.shape_cast %4 : vector<7x16x4xbf16> to vector<112x4xbf16>
    %c6 = arith.constant 6 : index
    %c0_6 = arith.constant 0 : index
    %c0_7 = arith.constant 0 : index
    %6 = vector.load %arg1[%c6, %c0_6, %c0_7] : memref<19x16x4xbf16, #tpu.memory_space<vmem>>, vector<7x16x4xbf16>
    %7 = vector.shape_cast %6 : vector<7x16x4xbf16> to vector<112x4xbf16>
    %c8 = arith.constant 8 : index
    %c0_8 = arith.constant 0 : index
    %c0_9 = arith.constant 0 : index
    %8 = vector.load %arg1[%c8, %c0_8, %c0_9] : memref<19x16x4xbf16, #tpu.memory_space<vmem>>, vector<7x16x4xbf16>
    %9 = vector.shape_cast %8 : vector<7x16x4xbf16> to vector<112x4xbf16>
    %c10 = arith.constant 10 : index
    %c0_10 = arith.constant 0 : index
    %c0_11 = arith.constant 0 : index
    %10 = vector.load %arg1[%c10, %c0_10, %c0_11] : memref<19x16x4xbf16, #tpu.memory_space<vmem>>, vector<7x16x4xbf16>
    %11 = vector.shape_cast %10 : vector<7x16x4xbf16> to vector<112x4xbf16>
    %c12 = arith.constant 12 : index
    %c0_12 = arith.constant 0 : index
    %c0_13 = arith.constant 0 : index
    %12 = vector.load %arg1[%c12, %c0_12, %c0_13] : memref<19x16x4xbf16, #tpu.memory_space<vmem>>, vector<7x16x4xbf16>
    %13 = vector.shape_cast %12 : vector<7x16x4xbf16> to vector<112x4xbf16>
    %14 = tpu.concatenate %1, %3, %5, %7, %9, %11, %13 in 1 : vector<112x4xbf16>, vector<112x4xbf16>, vector<112x4xbf16>, vector<112x4xbf16>, vector<112x4xbf16>, vector<112x4xbf16>, vector<112x4xbf16> -> vector<112x28xbf16>
    %c0_14 = arith.constant 0 : index
    %c0_15 = arith.constant 0 : index
    %15 = vector.load %arg2[%c0_14, %c0_15] : memref<28x8xbf16, #tpu.memory_space<vmem>>, vector<28x8xbf16>
    %cst = arith.constant dense<0.000000e+00> : vector<112x8xf32>
    %16 = tpu.matmul %14, %15, %cst {dimension_numbers = #tpu.dot_dimension_numbers<[1], [0], [0], [1], [0, 0, 1, 1], [], []>} : vector<112x28xbf16>, vector<28x8xbf16>, vector<112x8xf32> -> vector<112x8xf32>
    %c0_16 = arith.constant 0 : index
    %c0_17 = arith.constant 0 : index
    %17 = vector.load %arg3[%c0_16, %c0_17] : memref<1x8xf32, #tpu.memory_space<vmem>>, vector<1x8xf32>
    %18 = vector.broadcast %17 : vector<1x8xf32> to vector<112x8xf32>
    %19 = arith.addf %16, %18 : vector<112x8xf32>
    %20 = vector.shape_cast %19 : vector<112x8xf32> to vector<7x16x8xf32>
    %c0_18 = arith.constant 0 : index
    %c0_19 = arith.constant 0 : index
    %c0_20 = arith.constant 0 : index
    %21 = vector.load %arg4[%c0_18, %c0_19, %c0_20] : memref<7x16x8xf32, #tpu.memory_space<vmem>>, vector<7x16x8xf32>
    tpu.vector_store %arg4[%c0_18, %c0_19, %c0_20], %20 {strides = array<i32>} : memref<7x16x8xf32, #tpu.memory_space<vmem>>, vector<7x16x8xf32>,
    return
  }
  func.func @transform_0(%arg0: i32) -> (i32, i32, i32) {
    %c0_i32 = arith.constant 0 : i32
    %c0_i32_0 = arith.constant 0 : i32
    %c0_i32_1 = arith.constant 0 : i32
    return %c0_i32, %arg0, %c0_i32_0 : i32, i32, i32
  }
  func.func @transform_1(%arg0: i32) -> (i32, i32) {
    %c0_i32 = arith.constant 0 : i32
    %c0_i32_0 = arith.constant 0 : i32
    %c0_i32_1 = arith.constant 0 : i32
    return %c0_i32, %c0_i32_0 : i32, i32
  }
  func.func @transform_2(%arg0: i32) -> (i32, i32) {
    %c0_i32 = arith.constant 0 : i32
    %c0_i32_0 = arith.constant 0 : i32
    %c0_i32_1 = arith.constant 0 : i32
    return %c0_i32, %c0_i32_0 : i32, i32
  }
  func.func @transform_3(%arg0: i32) -> (i32, i32, i32) {
    %c0_i32 = arith.constant 0 : i32
    %c0_i32_0 = arith.constant 0 : i32
    %c0_i32_1 = arith.constant 0 : i32
    return %c0_i32, %arg0, %c0_i32_0 : i32, i32, i32
  }
}

</mosaic_0001>

<llo_original>
// kernel: tpu_custom_call.1
$region0: #{tpu_custom_call.1}
  #allocation0 [shape = 'u32[]', space=smem, size = 0x4, offset = 0x4, fixed_abs, tag = 'smem constant byte address 0x4 - core index']
  #allocation1 [shape = 'u32[72,128]{1,0:T(1,128)}', space=vmem, size = 0x9000, scoped, tag = 'internal scratch']
  %s0 = inlined_call_operand.vmem [shape: bf16[19,16,4], index: 0, kind: input, shape index: {}]
  %s1 = inlined_call_operand.vmem [shape: bf16[28,8], index: 1, kind: input, shape index: {}]
  %s2 = inlined_call_operand.vmem [shape: f32[1,8], index: 2, kind: input, shape index: {}]
  %s3 = inlined_call_operand.vmem [shape: f32[7,16,8], index: 3, kind: output, shape index: {}]
  %s4 = sld [smem:[#allocation0]]
  $region22: #{tpu_custom_call.1} parent=0
    _
  %s6 = ssub.s32 1, %s4
  %s7 = scalar_select 0, %s6, %s4
  // Predicated region
  $region2: #{tpu_custom_call.1} parent=0 // pred_check
    _
  $region3: #{tpu_custom_call.1} parent=0 // pred_check_branch
    %9 = sbr.rel (0) target = $region5
  $region4: #{tpu_custom_call.1} parent=0 // pred_region
    _
  $region5: #{tpu_custom_call.1} parent=0 // pred_fallthru
    _
  // Predicated region
  $region6: #{tpu_custom_call.1} parent=0 // pred_check
    _
  $region7: #{tpu_custom_call.1} parent=0 // pred_check_branch
    %11 = sbr.rel (0) target = $region9
  $region8: #{tpu_custom_call.1} parent=0 // pred_region
    _
  $region9: #{tpu_custom_call.1} parent=0 // pred_fallthru
    _
  // Predicated region
  $region10: #{tpu_custom_call.1} parent=0 // pred_check
    _
  $region11: #{tpu_custom_call.1} parent=0 // pred_check_branch
    %13 = sbr.rel (0) target = $region13
  $region12: #{tpu_custom_call.1} parent=0 // pred_region
    _
  $region13: #{tpu_custom_call.1} parent=0 // pred_fallthru
    _
  %v15 = vld [vmem:[%s0] sm:$0xf]
  %v16 = vld [vmem:[%s0 + $0x4] sm:$0xf]
  %v17 = vld [vmem:[%s0 + $0x8] sm:$0xf]
  %v18 = vld [vmem:[%s0 + $0xc] sm:$0xf]
  %v19 = vld [vmem:[%s0 + $0x10] sm:$0xf]
  %v20 = vld [vmem:[%s0 + $0x14] sm:$0xf]
  %v21 = vld [vmem:[%s0 + $0x18] sm:$0xf]
  %v22 = vld [vmem:[%s0 + $0x1c] sm:$0xf]
  %v23 = vld [vmem:[%s0 + $0x20] sm:$0xf]
  %v24 = vld [vmem:[%s0 + $0x24] sm:$0xf]
  %v25 = vld [vmem:[%s0 + $0x28] sm:$0xf]
  %v26 = vld [vmem:[%s0 + $0x2c] sm:$0xf]
  %v27 = vld [vmem:[%s0 + $0x30] sm:$0xf]
  %v28 = vld [vmem:[%s0 + $0x34] sm:$0xf]
  %s29 = scalar_lea.vmem %s0, 16
  %v30 = vld [vmem:[%s29] sm:$0xf]
  %v31 = vld [vmem:[%s29 + $0x4] sm:$0xf]
  %v32 = vld [vmem:[%s29 + $0x8] sm:$0xf]
  %v33 = vld [vmem:[%s29 + $0xc] sm:$0xf]
  %v34 = vld [vmem:[%s29 + $0x10] sm:$0xf]
  %v35 = vld [vmem:[%s29 + $0x14] sm:$0xf]
  %v36 = vld [vmem:[%s29 + $0x18] sm:$0xf]
  %v37 = vld [vmem:[%s29 + $0x1c] sm:$0xf]
  %v38 = vld [vmem:[%s29 + $0x20] sm:$0xf]
  %v39 = vld [vmem:[%s29 + $0x24] sm:$0xf]
  %v40 = vld [vmem:[%s29 + $0x28] sm:$0xf]
  %v41 = vld [vmem:[%s29 + $0x2c] sm:$0xf]
  %v42 = vld [vmem:[%s29 + $0x30] sm:$0xf]
  %v43 = vld [vmem:[%s29 + $0x34] sm:$0xf]
  %s44 = scalar_lea.vmem %s0, 32
  %v45 = vld [vmem:[%s44] sm:$0xf]
  %v46 = vld [vmem:[%s44 + $0x4] sm:$0xf]
  %v47 = vld [vmem:[%s44 + $0x8] sm:$0xf]
  %v48 = vld [vmem:[%s44 + $0xc] sm:$0xf]
  %v49 = vld [vmem:[%s44 + $0x10] sm:$0xf]
  %v50 = vld [vmem:[%s44 + $0x14] sm:$0xf]
  %v51 = vld [vmem:[%s44 + $0x18] sm:$0xf]
  %v52 = vld [vmem:[%s44 + $0x1c] sm:$0xf]
  %v53 = vld [vmem:[%s44 + $0x20] sm:$0xf]
  %v54 = vld [vmem:[%s44 + $0x24] sm:$0xf]
  %v55 = vld [vmem:[%s44 + $0x28] sm:$0xf]
  %v56 = vld [vmem:[%s44 + $0x2c] sm:$0xf]
  %v57 = vld [vmem:[%s44 + $0x30] sm:$0xf]
  %v58 = vld [vmem:[%s44 + $0x34] sm:$0xf]
  %s59 = scalar_lea.vmem %s0, 48
  %v60 = vld [vmem:[%s59] sm:$0xf]
  %v61 = vld [vmem:[%s59 + $0x4] sm:$0xf]
  %v62 = vld [vmem:[%s59 + $0x8] sm:$0xf]
  %v63 = vld [vmem:[%s59 + $0xc] sm:$0xf]
  %v64 = vld [vmem:[%s59 + $0x10] sm:$0xf]
  %v65 = vld [vmem:[%s59 + $0x14] sm:$0xf]
  %v66 = vld [vmem:[%s59 + $0x18] sm:$0xf]
  %v67 = vld [vmem:[%s59 + $0x1c] sm:$0xf]
  %v68 = vld [vmem:[%s59 + $0x20] sm:$0xf]
  %v69 = vld [vmem:[%s59 + $0x24] sm:$0xf]
  %v70 = vld [vmem:[%s59 + $0x28] sm:$0xf]
  %v71 = vld [vmem:[%s59 + $0x2c] sm:$0xf]
  %v72 = vld [vmem:[%s59 + $0x30] sm:$0xf]
  %v73 = vld [vmem:[%s59 + $0x34] sm:$0xf]
  %s74 = scalar_lea.vmem %s0, 64
  %v75 = vld [vmem:[%s74] sm:$0xf]
  %v76 = vld [vmem:[%s74 + $0x4] sm:$0xf]
  %v77 = vld [vmem:[%s74 + $0x8] sm:$0xf]
  %v78 = vld [vmem:[%s74 + $0xc] sm:$0xf]
  %v79 = vld [vmem:[%s74 + $0x10] sm:$0xf]
  %v80 = vld [vmem:[%s74 + $0x14] sm:$0xf]
  %v81 = vld [vmem:[%s74 + $0x18] sm:$0xf]
  %v82 = vld [vmem:[%s74 + $0x1c] sm:$0xf]
  %v83 = vld [vmem:[%s74 + $0x20] sm:$0xf]
  %v84 = vld [vmem:[%s74 + $0x24] sm:$0xf]
  %v85 = vld [vmem:[%s74 + $0x28] sm:$0xf]
  %v86 = vld [vmem:[%s74 + $0x2c] sm:$0xf]
  %v87 = vld [vmem:[%s74 + $0x30] sm:$0xf]
  %v88 = vld [vmem:[%s74 + $0x34] sm:$0xf]
  %s89 = scalar_lea.vmem %s0, 80
  %v90 = vld [vmem:[%s89] sm:$0xf]
  %v91 = vld [vmem:[%s89 + $0x4] sm:$0xf]
  %v92 = vld [vmem:[%s89 + $0x8] sm:$0xf]
  %v93 = vld [vmem:[%s89 + $0xc] sm:$0xf]
  %v94 = vld [vmem:[%s89 + $0x10] sm:$0xf]
  %v95 = vld [vmem:[%s89 + $0x14] sm:$0xf]
  %v96 = vld [vmem:[%s89 + $0x18] sm:$0xf]
  %v97 = vld [vmem:[%s89 + $0x1c] sm:$0xf]
  %v98 = vld [vmem:[%s89 + $0x20] sm:$0xf]
  %v99 = vld [vmem:[%s89 + $0x24] sm:$0xf]
  %v100 = vld [vmem:[%s89 + $0x28] sm:$0xf]
  %v101 = vld [vmem:[%s89 + $0x2c] sm:$0xf]
  %v102 = vld [vmem:[%s89 + $0x30] sm:$0xf]
  %v103 = vld [vmem:[%s89 + $0x34] sm:$0xf]
  %s104 = scalar_lea.vmem %s0, 96
  %v105 = vld [vmem:[%s104] sm:$0xf]
  %v106 = vld [vmem:[%s104 + $0x4] sm:$0xf]
  %v107 = vld [vmem:[%s104 + $0x8] sm:$0xf]
  %v108 = vld [vmem:[%s104 + $0xc] sm:$0xf]
  %v109 = vld [vmem:[%s104 + $0x10] sm:$0xf]
  %v110 = vld [vmem:[%s104 + $0x14] sm:$0xf]
  %v111 = vld [vmem:[%s104 + $0x18] sm:$0xf]
  %v112 = vld [vmem:[%s104 + $0x1c] sm:$0xf]
  %v113 = vld [vmem:[%s104 + $0x20] sm:$0xf]
  %v114 = vld [vmem:[%s104 + $0x24] sm:$0xf]
  %v115 = vld [vmem:[%s104 + $0x28] sm:$0xf]
  %v116 = vld [vmem:[%s104 + $0x2c] sm:$0xf]
  %v117 = vld [vmem:[%s104 + $0x30] sm:$0xf]
  %v118 = vld [vmem:[%s104 + $0x34] sm:$0xf]
  %v133 = vunpack.c.l.b16 %v15
  %v134 = vunpack.c.l.b16 %v16
  %v135 = vunpack.c.l.b16 %v17
  %v136 = vunpack.c.l.b16 %v18
  %v137 = vunpack.c.l.b16 %v19
  %v138 = vunpack.c.l.b16 %v20
  %v139 = vunpack.c.l.b16 %v21
  %v140 = vunpack.c.l.b16 %v22
  %v141 = vunpack.c.l.b16 %v23
  %v142 = vunpack.c.l.b16 %v24
  %v143 = vunpack.c.l.b16 %v25
  %v144 = vunpack.c.l.b16 %v26
  %v145 = vunpack.c.l.b16 %v27
  %v146 = vunpack.c.l.b16 %v28
  %v147 = vpack.c.b16 %v134, %v133
  %v148 = vpack.c.b16 %v136, %v135
  %v149 = vpack.c.b16 %v138, %v137
  %v150 = vpack.c.b16 %v140, %v139
  %v151 = vpack.c.b16 %v142, %v141
  %v152 = vpack.c.b16 %v144, %v143
  %v153 = vpack.c.b16 %v146, %v145
  %v168 = vunpack.c.l.b16 %v30
  %v169 = vunpack.c.l.b16 %v31
  %v170 = vunpack.c.l.b16 %v32
  %v171 = vunpack.c.l.b16 %v33
  %v172 = vunpack.c.l.b16 %v34
  %v173 = vunpack.c.l.b16 %v35
  %v174 = vunpack.c.l.b16 %v36
  %v175 = vunpack.c.l.b16 %v37
  %v176 = vunpack.c.l.b16 %v38
  %v177 = vunpack.c.l.b16 %v39
  %v178 = vunpack.c.l.b16 %v40
  %v179 = vunpack.c.l.b16 %v41
  %v180 = vunpack.c.l.b16 %v42
  %v181 = vunpack.c.l.b16 %v43
  %v182 = vpack.c.b16 %v169, %v168
  %v183 = vpack.c.b16 %v171, %v170
  %v184 = vpack.c.b16 %v173, %v172
  %v185 = vpack.c.b16 %v175, %v174
  %v186 = vpack.c.b16 %v177, %v176
  %v187 = vpack.c.b16 %v179, %v178
  %v188 = vpack.c.b16 %v181, %v180
  %189 = vrot.lane.b32.xlu0 %v182, 4
  %v190 = vpop.permute.xlu0 %189
  %191 = vrot.lane.b32.xlu0 %v183, 4
  %v192 = vpop.permute.xlu0 %191
  %193 = vrot.lane.b32.xlu0 %v184, 4
  %v194 = vpop.permute.xlu0 %193
  %195 = vrot.lane.b32.xlu0 %v185, 4
  %v196 = vpop.permute.xlu0 %195
  %197 = vrot.lane.b32.xlu0 %v186, 4
  %v198 = vpop.permute.xlu0 %197
  %199 = vrot.lane.b32.xlu0 %v187, 4
  %v200 = vpop.permute.xlu0 %199
  %201 = vrot.lane.b32.xlu0 %v188, 4
  %v202 = vpop.permute.xlu0 %201
  %v217 = vunpack.c.l.b16 %v45
  %v218 = vunpack.c.l.b16 %v46
  %v219 = vunpack.c.l.b16 %v47
  %v220 = vunpack.c.l.b16 %v48
  %v221 = vunpack.c.l.b16 %v49
  %v222 = vunpack.c.l.b16 %v50
  %v223 = vunpack.c.l.b16 %v51
  %v224 = vunpack.c.l.b16 %v52
  %v225 = vunpack.c.l.b16 %v53
  %v226 = vunpack.c.l.b16 %v54
  %v227 = vunpack.c.l.b16 %v55
  %v228 = vunpack.c.l.b16 %v56
  %v229 = vunpack.c.l.b16 %v57
  %v230 = vunpack.c.l.b16 %v58
  %v231 = vpack.c.b16 %v218, %v217
  %v232 = vpack.c.b16 %v220, %v219
  %v233 = vpack.c.b16 %v222, %v221
  %v234 = vpack.c.b16 %v224, %v223
  %v235 = vpack.c.b16 %v226, %v225
  %v236 = vpack.c.b16 %v228, %v227
  %v237 = vpack.c.b16 %v230, %v229
  %238 = vrot.lane.b32.xlu0 %v231, 8
  %v239 = vpop.permute.xlu0 %238
  %240 = vrot.lane.b32.xlu0 %v232, 8
  %v241 = vpop.permute.xlu0 %240
  %242 = vrot.lane.b32.xlu0 %v233, 8
  %v243 = vpop.permute.xlu0 %242
  %244 = vrot.lane.b32.xlu0 %v234, 8
  %v245 = vpop.permute.xlu0 %244
  %246 = vrot.lane.b32.xlu0 %v235, 8
  %v247 = vpop.permute.xlu0 %246
  %248 = vrot.lane.b32.xlu0 %v236, 8
  %v249 = vpop.permute.xlu0 %248
  %250 = vrot.lane.b32.xlu0 %v237, 8
  %v251 = vpop.permute.xlu0 %250
  %v266 = vunpack.c.l.b16 %v60
  %v267 = vunpack.c.l.b16 %v61
  %v268 = vunpack.c.l.b16 %v62
  %v269 = vunpack.c.l.b16 %v63
  %v270 = vunpack.c.l.b16 %v64
  %v271 = vunpack.c.l.b16 %v65
  %v272 = vunpack.c.l.b16 %v66
  %v273 = vunpack.c.l.b16 %v67
  %v274 = vunpack.c.l.b16 %v68
  %v275 = vunpack.c.l.b16 %v69
  %v276 = vunpack.c.l.b16 %v70
  %v277 = vunpack.c.l.b16 %v71
  %v278 = vunpack.c.l.b16 %v72
  %v279 = vunpack.c.l.b16 %v73
  %v280 = vpack.c.b16 %v267, %v266
  %v281 = vpack.c.b16 %v269, %v268
  %v282 = vpack.c.b16 %v271, %v270
  %v283 = vpack.c.b16 %v273, %v272
  %v284 = vpack.c.b16 %v275, %v274
  %v285 = vpack.c.b16 %v277, %v276
  %v286 = vpack.c.b16 %v279, %v278
  %287 = vrot.lane.b32.xlu0 %v280, 12
  %v288 = vpop.permute.xlu0 %287
  %289 = vrot.lane.b32.xlu0 %v281, 12
  %v290 = vpop.permute.xlu0 %289
  %291 = vrot.lane.b32.xlu0 %v282, 12
  %v292 = vpop.permute.xlu0 %291
  %293 = vrot.lane.b32.xlu0 %v283, 12
  %v294 = vpop.permute.xlu0 %293
  %295 = vrot.lane.b32.xlu0 %v284, 12
  %v296 = vpop.permute.xlu0 %295
  %297 = vrot.lane.b32.xlu0 %v285, 12
  %v298 = vpop.permute.xlu0 %297
  %299 = vrot.lane.b32.xlu0 %v286, 12
  %v300 = vpop.permute.xlu0 %299
  %v315 = vunpack.c.l.b16 %v75
  %v316 = vunpack.c.l.b16 %v76
  %v317 = vunpack.c.l.b16 %v77
  %v318 = vunpack.c.l.b16 %v78
  %v319 = vunpack.c.l.b16 %v79
  %v320 = vunpack.c.l.b16 %v80
  %v321 = vunpack.c.l.b16 %v81
  %v322 = vunpack.c.l.b16 %v82
  %v323 = vunpack.c.l.b16 %v83
  %v324 = vunpack.c.l.b16 %v84
  %v325 = vunpack.c.l.b16 %v85
  %v326 = vunpack.c.l.b16 %v86
  %v327 = vunpack.c.l.b16 %v87
  %v328 = vunpack.c.l.b16 %v88
  %v329 = vpack.c.b16 %v316, %v315
  %v330 = vpack.c.b16 %v318, %v317
  %v331 = vpack.c.b16 %v320, %v319
  %v332 = vpack.c.b16 %v322, %v321
  %v333 = vpack.c.b16 %v324, %v323
  %v334 = vpack.c.b16 %v326, %v325
  %v335 = vpack.c.b16 %v328, %v327
  %336 = vrot.lane.b32.xlu0 %v329, 16
  %v337 = vpop.permute.xlu0 %336
  %338 = vrot.lane.b32.xlu0 %v330, 16
  %v339 = vpop.permute.xlu0 %338
  %340 = vrot.lane.b32.xlu0 %v331, 16
  %v341 = vpop.permute.xlu0 %340
  %342 = vrot.lane.b32.xlu0 %v332, 16
  %v343 = vpop.permute.xlu0 %342
  %344 = vrot.lane.b32.xlu0 %v333, 16
  %v345 = vpop.permute.xlu0 %344
  %346 = vrot.lane.b32.xlu0 %v334, 16
  %v347 = vpop.permute.xlu0 %346
  %348 = vrot.lane.b32.xlu0 %v335, 16
  %v349 = vpop.permute.xlu0 %348
  %v364 = vunpack.c.l.b16 %v90
  %v365 = vunpack.c.l.b16 %v91
  %v366 = vunpack.c.l.b16 %v92
  %v367 = vunpack.c.l.b16 %v93
  %v368 = vunpack.c.l.b16 %v94
  %v369 = vunpack.c.l.b16 %v95
  %v370 = vunpack.c.l.b16 %v96
  %v371 = vunpack.c.l.b16 %v97
  %v372 = vunpack.c.l.b16 %v98
  %v373 = vunpack.c.l.b16 %v99
  %v374 = vunpack.c.l.b16 %v100
  %v375 = vunpack.c.l.b16 %v101
  %v376 = vunpack.c.l.b16 %v102
  %v377 = vunpack.c.l.b16 %v103
  %v378 = vpack.c.b16 %v365, %v364
  %v379 = vpack.c.b16 %v367, %v366
  %v380 = vpack.c.b16 %v369, %v368
  %v381 = vpack.c.b16 %v371, %v370
  %v382 = vpack.c.b16 %v373, %v372
  %v383 = vpack.c.b16 %v375, %v374
  %v384 = vpack.c.b16 %v377, %v376
  %385 = vrot.lane.b32.xlu0 %v378, 20
  %v386 = vpop.permute.xlu0 %385
  %387 = vrot.lane.b32.xlu0 %v379, 20
  %v388 = vpop.permute.xlu0 %387
  %389 = vrot.lane.b32.xlu0 %v380, 20
  %v390 = vpop.permute.xlu0 %389
  %391 = vrot.lane.b32.xlu0 %v381, 20
  %v392 = vpop.permute.xlu0 %391
  %393 = vrot.lane.b32.xlu0 %v382, 20
  %v394 = vpop.permute.xlu0 %393
  %395 = vrot.lane.b32.xlu0 %v383, 20
  %v396 = vpop.permute.xlu0 %395
  %397 = vrot.lane.b32.xlu0 %v384, 20
  %v398 = vpop.permute.xlu0 %397
  %v413 = vunpack.c.l.b16 %v105
  %v414 = vunpack.c.l.b16 %v106
  %v415 = vunpack.c.l.b16 %v107
  %v416 = vunpack.c.l.b16 %v108
  %v417 = vunpack.c.l.b16 %v109
  %v418 = vunpack.c.l.b16 %v110
  %v419 = vunpack.c.l.b16 %v111
  %v420 = vunpack.c.l.b16 %v112
  %v421 = vunpack.c.l.b16 %v113
  %v422 = vunpack.c.l.b16 %v114
  %v423 = vunpack.c.l.b16 %v115
  %v424 = vunpack.c.l.b16 %v116
  %v425 = vunpack.c.l.b16 %v117
  %v426 = vunpack.c.l.b16 %v118
  %v427 = vpack.c.b16 %v414, %v413
  %v428 = vpack.c.b16 %v416, %v415
  %v429 = vpack.c.b16 %v418, %v417
  %v430 = vpack.c.b16 %v420, %v419
  %v431 = vpack.c.b16 %v422, %v421
  %v432 = vpack.c.b16 %v424, %v423
  %v433 = vpack.c.b16 %v426, %v425
  %434 = vrot.lane.b32.xlu0 %v427, 24
  %v435 = vpop.permute.xlu0 %434
  %436 = vrot.lane.b32.xlu0 %v428, 24
  %v437 = vpop.permute.xlu0 %436
  %438 = vrot.lane.b32.xlu0 %v429, 24
  %v439 = vpop.permute.xlu0 %438
  %440 = vrot.lane.b32.xlu0 %v430, 24
  %v441 = vpop.permute.xlu0 %440
  %442 = vrot.lane.b32.xlu0 %v431, 24
  %v443 = vpop.permute.xlu0 %442
  %444 = vrot.lane.b32.xlu0 %v432, 24
  %v445 = vpop.permute.xlu0 %444
  %446 = vrot.lane.b32.xlu0 %v433, 24
  %v447 = vpop.permute.xlu0 %446
  %vm448 = vcmask 31744
  %v451 = vsel %vm448, %v147, %v190
  %v454 = vsel %vm448, %v148, %v192
  %v457 = vsel %vm448, %v149, %v194
  %v460 = vsel %vm448, %v150, %v196
  %v463 = vsel %vm448, %v151, %v198
  %v466 = vsel %vm448, %v152, %v200
  %v469 = vsel %vm448, %v153, %v202
  %vm470 = vcmask 64512
  %v472 = vsel %vm470, %v451, %v239
  %v474 = vsel %vm470, %v454, %v241
  %v476 = vsel %vm470, %v457, %v243
  %v478 = vsel %vm470, %v460, %v245
  %v480 = vsel %vm470, %v463, %v247
  %v482 = vsel %vm470, %v466, %v249
  %v484 = vsel %vm470, %v469, %v251
  %vm485 = vcmask 97280
  %v487 = vsel %vm485, %v472, %v288
  %v489 = vsel %vm485, %v474, %v290
  %v491 = vsel %vm485, %v476, %v292
  %v493 = vsel %vm485, %v478, %v294
  %v495 = vsel %vm485, %v480, %v296
  %v497 = vsel %vm485, %v482, %v298
  %v499 = vsel %vm485, %v484, %v300
  %vm500 = vcmask 130048
  %v502 = vsel %vm500, %v487, %v337
  %v504 = vsel %vm500, %v489, %v339
  %v506 = vsel %vm500, %v491, %v341
  %v508 = vsel %vm500, %v493, %v343
  %v510 = vsel %vm500, %v495, %v345
  %v512 = vsel %vm500, %v497, %v347
  %v514 = vsel %vm500, %v499, %v349
  %vm515 = vcmask 162816
  %v517 = vsel %vm515, %v502, %v386
  %v519 = vsel %vm515, %v504, %v388
  %v521 = vsel %vm515, %v506, %v390
  %v523 = vsel %vm515, %v508, %v392
  %v525 = vsel %vm515, %v510, %v394
  %v527 = vsel %vm515, %v512, %v396
  %v529 = vsel %vm515, %v514, %v398
  %vm530 = vcmask 195584
  %v532 = vsel %vm530, %v517, %v435
  %v534 = vsel %vm530, %v519, %v437
  %v536 = vsel %vm530, %v521, %v439
  %v538 = vsel %vm530, %v523, %v441
  %v540 = vsel %vm530, %v525, %v443
  %v542 = vsel %vm530, %v527, %v445
  %v544 = vsel %vm530, %v529, %v447
  %v545 = vld [vmem:[%s1] sm:$0xf]
  %v546 = vld [vmem:[%s1 + $0x4] sm:$0xf]
  %v547 = vld [vmem:[%s1 + $0x8] sm:$0xf]
  %v548 = vld [vmem:[%s1 + $0xc] sm:$0x3]
  %v549 = vld [vmem:[%s2] sm:$0x1]
  %v551 = vperm.slane %v549, 0
  %v557 = vunpack.c.l.b16 %v545
  %v558 = vunpack.c.l.b16 %v546
  %v559 = vunpack.c.l.b16 %v547
  %v560 = vunpack.c.l.b16 %v548
  %v561 = vpack.c.b16 %v558, %v557
  %v562 = vpack.c.b16 %v560, %v559
  %vm564 = vcmask 228352
  %v565 = vsel %vm564, %v532, 0
  %v567 = vsel %vm564, %v534, 0
  %v569 = vsel %vm564, %v536, 0
  %v571 = vsel %vm564, %v538, 0
  %v573 = vsel %vm564, %v540, 0
  %v575 = vsel %vm564, %v542, 0
  %v577 = vsel %vm564, %v544, 0
  %vm579 = vcmask 1045504
  %v581 = vsel %vm579, %v562, 0
  %583 = vmatpush.bf16.msra.mxu0 0
  %584 = vmatpush.bf16.msra.mxu0 0
  %585 = vmatpush.bf16.msra.mxu0 0
  %586 = vmatpush.bf16.msra.mxu0 0
  %587 = vmatpush.bf16.msra.mxu0 0
  %588 = vmatpush.bf16.msra.mxu0 0
  %589 = vmatpush.bf16.msra.mxu0 %v581
  %590 = vmatpush.bf16.msra.mxu0 %v561
  %591 = vmatmul.bf16.gmra.mxu0 %v565
  %v592 = vpop.f32.mrf.mxu0
  %v593 = vadd.f32 %v551, %v592
  %v594 = vpop.f32.mrf.mxu0
  %v595 = vadd.f32 %v551, %v594
  %596 = vmatmul.bf16.gmra.mxu0 %v567
  %v597 = vpop.f32.mrf.mxu0
  %v598 = vadd.f32 %v551, %v597
  %v599 = vpop.f32.mrf.mxu0
  %v600 = vadd.f32 %v551, %v599
  %601 = vmatmul.bf16.gmra.mxu0 %v569
  %v602 = vpop.f32.mrf.mxu0
  %v603 = vadd.f32 %v551, %v602
  %v604 = vpop.f32.mrf.mxu0
  %v605 = vadd.f32 %v551, %v604
  %606 = vmatmul.bf16.gmra.mxu0 %v571
  %v607 = vpop.f32.mrf.mxu0
  %v608 = vadd.f32 %v551, %v607
  %v609 = vpop.f32.mrf.mxu0
  %v610 = vadd.f32 %v551, %v609
  %611 = vmatmul.bf16.gmra.mxu0 %v573
  %v612 = vpop.f32.mrf.mxu0
  %v613 = vadd.f32 %v551, %v612
  %v614 = vpop.f32.mrf.mxu0
  %v615 = vadd.f32 %v551, %v614
  %616 = vmatmul.bf16.gmra.mxu0 %v575
  %v617 = vpop.f32.mrf.mxu0
  %v618 = vadd.f32 %v551, %v617
  %v619 = vpop.f32.mrf.mxu0
  %v620 = vadd.f32 %v551, %v619
  %621 = vmatmul.bf16.gmra.mxu0 %v577
  %v622 = vpop.f32.mrf.mxu0
  %v623 = vadd.f32 %v551, %v622
  %v624 = vpop.f32.mrf.mxu0
  %v625 = vadd.f32 %v551, %v624
  %626 = vdwg.mxu0
  %627 = vst.msk [vmem:[%s3] sm:$0xff] %vm470, %v593
  %628 = vst.msk [vmem:[%s3 + $0x8] sm:$0xff] %vm470, %v595
  %629 = vst.msk [vmem:[%s3 + $0x10] sm:$0xff] %vm470, %v598
  %630 = vst.msk [vmem:[%s3 + $0x18] sm:$0xff] %vm470, %v600
  %631 = vst.msk [vmem:[%s3 + $0x20] sm:$0xff] %vm470, %v603
  %632 = vst.msk [vmem:[%s3 + $0x28] sm:$0xff] %vm470, %v605
  %633 = vst.msk [vmem:[%s3 + $0x30] sm:$0xff] %vm470, %v608
  %634 = vst.msk [vmem:[%s3 + $0x38] sm:$0xff] %vm470, %v610
  %635 = vst.msk [vmem:[%s3 + $0x40] sm:$0xff] %vm470, %v613
  %636 = vst.msk [vmem:[%s3 + $0x48] sm:$0xff] %vm470, %v615
  %637 = vst.msk [vmem:[%s3 + $0x50] sm:$0xff] %vm470, %v618
  %638 = vst.msk [vmem:[%s3 + $0x58] sm:$0xff] %vm470, %v620
  %639 = vst.msk [vmem:[%s3 + $0x60] sm:$0xff] %vm470, %v623
  %640 = vst.msk [vmem:[%s3 + $0x68] sm:$0xff] %vm470, %v625
  // Predicated region
  $region14: #{tpu_custom_call.1} parent=0 // pred_check
    _
  $region15: #{tpu_custom_call.1} parent=0 // pred_check_branch
    %642 = sbr.rel (0) target = $region17
  $region16: #{tpu_custom_call.1} parent=0 // pred_region
    _
  $region17: #{tpu_custom_call.1} parent=0 // pred_fallthru
    _
  // Predicated region
  $region18: #{tpu_custom_call.1} parent=0 // pred_check
    _
  $region19: #{tpu_custom_call.1} parent=0 // pred_check_branch
    %644 = sbr.rel (0) target = $region21
  $region20: #{tpu_custom_call.1} parent=0 // pred_region
    _
  $region21: #{tpu_custom_call.1} parent=0 // pred_fallthru
    _

</llo_original>
